<compile_context>
chip_gen: v7x
topology: tpu7x:2x2x1
jax: 0.10.0
libtpu: 0.0.40
codegen_flags: <defaults>
</compile_context>

<pallas_src>
import jax
import jax.numpy as jnp
from jax.experimental import pallas as pl
from jax.experimental.pallas import tpu as pltpu


def _round_up(x, m):
    return ((x + m - 1) // m) * m


def _align_m(v):
    """Token-tile alignment: multiple of 256, minimum 128."""
    v = max(int(v), 1)
    return 128 if v <= 128 else _round_up(v, 256)


def _pad2d(a, rows, cols):
    if a.shape == (rows, cols):
        return a
    return jnp.pad(a, ((0, rows - a.shape[0]), (0, cols - a.shape[1])))


def _vmem_capacity_bytes():
    """Best-effort per-TensorCore VMEM capacity query (conservative fallback)."""
    try:
        return int(pltpu.get_tpu_info().vmem_capacity_bytes)
    except Exception:
        pass
    try:
        kind = jax.devices()[0].device_kind.lower()
        if "v7" in kind:
            return 64 << 20
        return 128 << 20
    except Exception:
        return 64 << 20  # safe everywhere (only yields smaller tiles)


# ---------------------------------------------------------------------------
# Kernels
# ---------------------------------------------------------------------------

def _ffn_kernel_single(x_ref, w1_ref, b1_ref, w2_ref, b2_ref, o_ref):
    """Single d_ff step: weights VMEM-resident, no accumulator round-trip."""
    h = jnp.dot(x_ref[...], w1_ref[...], preferred_element_type=jnp.float32)
    h = jnp.maximum(h + b1_ref[...].astype(jnp.float32), 0.0)
    # Dropout == identity (eval mode).
    acc = jnp.dot(h.astype(w2_ref.dtype), w2_ref[...],
                  preferred_element_type=jnp.float32)
    o_ref[...] = (acc + b2_ref[...].astype(jnp.float32)).astype(o_ref.dtype)


def _ffn_kernel_reduce(x_ref, w1_ref, b1_ref, w2_ref, b2_ref, o_ref, acc_ref):
    """d_ff tiled: reduce over f with an f32 VMEM accumulator."""
    f = pl.program_id(1)

    h = jnp.dot(x_ref[...], w1_ref[...], preferred_element_type=jnp.float32)
    h = jnp.maximum(h + b1_ref[...].astype(jnp.float32), 0.0)
    # Dropout == identity (eval mode).
    partial = jnp.dot(h.astype(w2_ref.dtype), w2_ref[...],
                      preferred_element_type=jnp.float32)

    # Fold init into the first step: no zero-fill store + reload of acc.
    @pl.when(f == 0)
    def _first():
        acc_ref[...] = partial

    @pl.when(f > 0)
    def _rest():
        acc_ref[...] += partial

    @pl.when(f == pl.num_programs(1) - 1)
    def _finalize():
        o_ref[...] = (acc_ref[...] + b2_ref[...].astype(jnp.float32)
                      ).astype(o_ref.dtype)


# ---------------------------------------------------------------------------
# Wrapper
# ---------------------------------------------------------------------------

def feed_forward(x, w1, b1, w2, b2, *, dropout_p=0.0, tile_m=None, tile_f=None):
    """x: (..., d_model) -> (..., d_model).  Weights are (in, out) layout."""
    # TODO(synk): training-mode dropout not implemented; only eval mode.
    assert dropout_p == 0.0, "only eval-mode (identity) dropout is implemented"

    d_model = x.shape[-1]
    d_ff = w1.shape[-1]
    lead = x.shape[:-1]
    out_dtype = x.dtype

    x2d = x.reshape(-1, d_model)
    M = x2d.shape[0]
    dmp = _round_up(d_model, 128)          # lane-dense output columns
    dfp_full = _round_up(d_ff, 256)        # 256-aligned for the 256-wide MXUs

    # ---- generation-aware VMEM budget --------------------------------------
    vmem_cap = _vmem_capacity_bytes()
    if vmem_cap >= (96 << 20):             # v5e / v6e: 128 MiB VMEM, 1 TC
        budget, gen_limit, n_cores = 100 << 20, 110 << 20, 1
    else:                                   # v7x: 64 MiB per TC, 2 TCs
        budget, gen_limit, n_cores = 44 << 20, 52 << 20, 2

    x_sz = jnp.dtype(w1.dtype).itemsize     # x is cast to the weight dtype
    w_sz = jnp.dtype(w1.dtype).itemsize
    o_sz = jnp.dtype(out_dtype).itemsize

    def _vmem_bytes(tm, tf):
        # double-buffered pipeline buffers
        dbl = 2 * (tm * dmp * x_sz                   # x block
                   + dmp * tf * w_sz + tf * w_sz     # w1, b1 blocks
                   + tf * dmp * w_sz + dmp * w_sz    # w2, b2 blocks
                   + tm * dmp * o_sz)                # out block
        inter = tm * tf * 4 + tm * tf * w_sz         # h (f32) + cast copy
        acc = tm * dmp * 4                           # f32 accumulator scratch
        scratch = 2 << 20                            # Mosaic internal scratch
        return dbl + inter + acc + scratch

    # ---- tile selection -----------------------------------------------------
    auto_tile_m = tile_m is None
    if auto_tile_m:
        # Big token tiles: intensity per weight byte == tile_m.
        tile_m = _align_m(min(M, 1024))
    else:
        tile_m = _align_m(tile_m)

    if tile_f is None:
        tile_f = dfp_full                   # try full d_ff residency (n_f == 1)
    else:
        tile_f = max(256, _round_up(tile_f, 256))

    # Shrink tile_f first (total weight traffic depends on tile_m, not tile_f).
    while _vmem_bytes(tile_m, tile_f) > budget and tile_f > 256:
        tile_f = max(256, _round_up(tile_f // 2, 256))
    while _vmem_bytes(tile_m, tile_f) > budget and tile_m > 128:
        nxt = tile_m // 2
        tile_m = 128 if nxt <= 128 else _round_up(nxt, 256)

    # On 2-TC chips, prefer an even token-tile count so both cores stay busy.
    if auto_tile_m and n_cores >= 2 and M > tile_m:
        n_tok = pl.cdiv(M, tile_m)
        if n_tok % 2 == 1:
            cand = _align_m(pl.cdiv(M, n_tok + 1))
            if _vmem_bytes(cand, tile_f) <= budget:
                tile_m = cand

    Mp = _round_up(M, tile_m)
    dfp = _round_up(d_ff, tile_f)
    n_m = Mp // tile_m
    n_f = dfp // tile_f

    # ---- zero-pad to tile-aligned, lane-dense shapes ------------------------
    xp = _pad2d(x2d, Mp, dmp).astype(w1.dtype)
    w1p = _pad2d(w1, dmp, dfp)
    b1p = _pad2d(b1.reshape(1, -1), 1, dfp)
    w2p = _pad2d(w2, dfp, dmp)
    b2p = _pad2d(b2.reshape(1, -1), 1, dmp)

    # Weights read once when VMEM-resident (grid-invariant index_map), else
    # re-streamed once per token tile.
    weight_reads = 1 if n_f == 1 else n_m
    cost = pl.CostEstimate(
        flops=4 * Mp * dmp * dfp,            # two matmuls
        transcendentals=0,
        bytes_accessed=int(xp.nbytes + b2p.nbytes + Mp * dmp * o_sz
                           + weight_reads * (w1p.nbytes + w2p.nbytes
                                             + b1p.nbytes)),
    )

    vmem_limit = int(min(gen_limit,
                         max(48 << 20, _vmem_bytes(tile_m, tile_f) + (6 << 20))))

    if n_f == 1:
        # Weights VMEM-resident across all token tiles; no reduction axis.
        out = pl.pallas_call(
            _ffn_kernel_single,
            out_shape=jax.ShapeDtypeStruct((Mp, dmp), out_dtype),
            grid_spec=pltpu.PrefetchScalarGridSpec(
                num_scalar_prefetch=0,
                grid=(n_m,),
                in_specs=[
                    pl.BlockSpec((tile_m, dmp), lambda i: (i, 0)),   # x
                    pl.BlockSpec((dmp, tile_f), lambda i: (0, 0)),   # w1 (resident)
                    pl.BlockSpec((1, tile_f), lambda i: (0, 0)),     # b1
                    pl.BlockSpec((tile_f, dmp), lambda i: (0, 0)),   # w2 (resident)
                    pl.BlockSpec((1, dmp), lambda i: (0, 0)),        # b2
                ],
                out_specs=pl.BlockSpec((tile_m, dmp), lambda i: (i, 0)),
            ),
            compiler_params=pltpu.CompilerParams(
                dimension_semantics=("parallel",),
                vmem_limit_bytes=vmem_limit,
            ),
            cost_estimate=cost,
        )(xp, w1p, b1p, w2p, b2p)
    else:
        out = pl.pallas_call(
            _ffn_kernel_reduce,
            out_shape=jax.ShapeDtypeStruct((Mp, dmp), out_dtype),
            grid_spec=pltpu.PrefetchScalarGridSpec(
                num_scalar_prefetch=0,
                grid=(n_m, n_f),
                in_specs=[
                    pl.BlockSpec((tile_m, dmp), lambda i, f: (i, 0)),   # x
                    pl.BlockSpec((dmp, tile_f), lambda i, f: (0, f)),   # w1
                    pl.BlockSpec((1, tile_f), lambda i, f: (0, f)),     # b1
                    pl.BlockSpec((tile_f, dmp), lambda i, f: (f, 0)),   # w2
                    pl.BlockSpec((1, dmp), lambda i, f: (0, 0)),        # b2
                ],
                out_specs=pl.BlockSpec((tile_m, dmp), lambda i, f: (i, 0)),
                scratch_shapes=[pltpu.VMEM((tile_m, dmp), jnp.float32)],
            ),
            compiler_params=pltpu.CompilerParams(
                dimension_semantics=("parallel", "arbitrary"),
                vmem_limit_bytes=vmem_limit,
            ),
            cost_estimate=cost,
        )(xp, w1p, b1p, w2p, b2p)

    return out[:M, :d_model].reshape(*lead, d_model)


def init_params(key, d_model, d_ff, dtype=jnp.float32):
    """Deterministic init mimicking torch.nn.Linear (uniform +-1/sqrt(fan_in))."""
    k1, k2, k3, k4 = jax.random.split(key, 4)
    lim1 = 1.0 / (d_model ** 0.5)
    lim2 = 1.0 / (d_ff ** 0.5)
    w1 = jax.random.uniform(k1, (d_model, d_ff), dtype, -lim1, lim1)
    b1 = jax.random.uniform(k2, (d_ff,), dtype, -lim1, lim1)
    w2 = jax.random.uniform(k3, (d_ff, d_model), dtype, -lim2, lim2)
    b2 = jax.random.uniform(k4, (d_model,), dtype, -lim2, lim2)
    return w1, b1, w2, b2


def _ref_ffn(x, w1, b1, w2, b2):
    return jnp.maximum(x @ w1 + b1, 0.0) @ w2 + b2


if __name__ == "__main__":
    batch, seq, d_model, d_ff = 2, 8, 32, 64
    key = jax.random.PRNGKey(0)
    kx, kp = jax.random.split(key)

    x = jax.random.normal(kx, (batch, seq, d_model), jnp.float32)
    w1, b1, w2, b2 = init_params(kp, d_model, d_ff)

    # f32 path, single-step (weight-resident) kernel, tight check
    out = jax.block_until_ready(feed_forward(x, w1, b1, w2, b2))
    ref = _ref_ffn(x, w1, b1, w2, b2)
    assert out.shape == (batch, seq, d_model)
    assert jnp.allclose(out, ref, atol=1e-5, rtol=1e-5)

    # ragged token count (exercises the padding / tile-tail path)
    x2 = jax.random.normal(jax.random.PRNGKey(1), (3, 5, d_model), jnp.float32)
    out2 = jax.block_until_ready(feed_forward(x2, w1, b1, w2, b2))
    ref2 = _ref_ffn(x2, w1, b1, w2, b2)
    assert out2.shape == (3, 5, d_model)
    assert jnp.allclose(out2, ref2, atol=1e-5, rtol=1e-5)

    # bf16 weights (MXU-friendly operands, f32 accumulation), loose tolerance
    out_bf = jax.block_until_ready(
        feed_forward(x, w1.astype(jnp.bfloat16), b1.astype(jnp.bfloat16),
                     w2.astype(jnp.bfloat16), b2.astype(jnp.bfloat16)))
    assert jnp.allclose(out_bf.astype(jnp.float32), ref, atol=1e-1, rtol=1e-1)

    # multi-step reduction kernel: force several d_ff tiles and token tiles
    d_ff_big = 512
    w1b, b1b, w2b, b2b = init_params(jax.random.PRNGKey(2), d_model, d_ff_big)
    x3 = jax.random.normal(jax.random.PRNGKey(3), (4, 80, d_model), jnp.float32)
    out3 = jax.block_until_ready(
        feed_forward(x3, w1b, b1b, w2b, b2b, tile_m=128, tile_f=256))
    ref3 = _ref_ffn(x3, w1b, b1b, w2b, b2b)
    assert out3.shape == (4, 80, d_model)
    assert jnp.allclose(out3, ref3, atol=1e-4, rtol=1e-4)

    print("KERNEL_OK")
</pallas_src>

<mosaic_0001>
module attributes {stable_mosaic.version = 11 : i64} {
  func.func @_ffn_kernel_single(%arg0: i32, %arg1: memref<128x128xf32, #tpu.memory_space<vmem>>, %arg2: memref<128x256xf32, #tpu.memory_space<vmem>>, %arg3: memref<1x256xf32, #tpu.memory_space<vmem>>, %arg4: memref<256x128xf32, #tpu.memory_space<vmem>>, %arg5: memref<1x128xf32, #tpu.memory_space<vmem>>, %arg6: memref<128x128xf32, #tpu.memory_space<vmem>>) attributes {dimension_semantics = [#tpu.dimension_semantics<parallel>], iteration_bounds = array<i64: 1>, scalar_prefetch = 0 : i64, scratch_operands = 0 : i64, tpu.core_type = #tpu.core_type<tc>, window_params = [{transform_indices = @transform_0, window_bounds = array<i64: 128, 128>}, {pipeline_mode = #tpu.pipeline_mode<synchronous>, transform_indices = @transform_1, window_bounds = array<i64: 128, 256>}, {pipeline_mode = #tpu.pipeline_mode<synchronous>, transform_indices = @transform_2, window_bounds = array<i64: 1, 256>}, {pipeline_mode = #tpu.pipeline_mode<synchronous>, transform_indices = @transform_3, window_bounds = array<i64: 256, 128>}, {pipeline_mode = #tpu.pipeline_mode<synchronous>, transform_indices = @transform_4, window_bounds = array<i64: 1, 128>}, {transform_indices = @transform_5, window_bounds = array<i64: 128, 128>}]} {
    %c0 = arith.constant 0 : index
    %c0_0 = arith.constant 0 : index
    %0 = vector.load %arg1[%c0, %c0_0] : memref<128x128xf32, #tpu.memory_space<vmem>>, vector<128x128xf32>
    %c0_1 = arith.constant 0 : index
    %c0_2 = arith.constant 0 : index
    %1 = vector.load %arg2[%c0_1, %c0_2] : memref<128x256xf32, #tpu.memory_space<vmem>>, vector<128x256xf32>
    %cst = arith.constant dense<0.000000e+00> : vector<128x256xf32>
    %2 = tpu.matmul %0, %1, %cst {dimension_numbers = #tpu.dot_dimension_numbers<[1], [0], [0], [1], [0, 0, 1, 1], [], []>} : vector<128x128xf32>, vector<128x256xf32>, vector<128x256xf32> -> vector<128x256xf32>
    %c0_3 = arith.constant 0 : index
    %c0_4 = arith.constant 0 : index
    %3 = vector.load %arg3[%c0_3, %c0_4] : memref<1x256xf32, #tpu.memory_space<vmem>>, vector<1x256xf32>
    %4 = vector.broadcast %3 : vector<1x256xf32> to vector<128x256xf32>
    %5 = arith.addf %2, %4 : vector<128x256xf32>
    %cst_5 = arith.constant 0.000000e+00 : f32
    %6 = vector.broadcast %cst_5 : f32 to vector<128x256xf32>
    %7 = arith.maximumf %5, %6 : vector<128x256xf32>
    %c0_6 = arith.constant 0 : index
    %c0_7 = arith.constant 0 : index
    %8 = vector.load %arg4[%c0_6, %c0_7] : memref<256x128xf32, #tpu.memory_space<vmem>>, vector<256x128xf32>
    %cst_8 = arith.constant dense<0.000000e+00> : vector<128x128xf32>
    %9 = tpu.matmul %7, %8, %cst_8 {dimension_numbers = #tpu.dot_dimension_numbers<[1], [0], [0], [1], [0, 0, 1, 1], [], []>} : vector<128x256xf32>, vector<256x128xf32>, vector<128x128xf32> -> vector<128x128xf32>
    %c0_9 = arith.constant 0 : index
    %c0_10 = arith.constant 0 : index
    %10 = vector.load %arg5[%c0_9, %c0_10] : memref<1x128xf32, #tpu.memory_space<vmem>>, vector<1x128xf32>
    %11 = vector.broadcast %10 : vector<1x128xf32> to vector<128x128xf32>
    %12 = arith.addf %9, %11 : vector<128x128xf32>
    %c0_11 = arith.constant 0 : index
    %c0_12 = arith.constant 0 : index
    %13 = vector.load %arg6[%c0_11, %c0_12] : memref<128x128xf32, #tpu.memory_space<vmem>>, vector<128x128xf32>
    tpu.vector_store %arg6[%c0_11, %c0_12], %12 {strides = array<i32>} : memref<128x128xf32, #tpu.memory_space<vmem>>, vector<128x128xf32>,
    return
  }
  func.func @transform_0(%arg0: i32) -> (i32, i32) {
    %c0_i32 = arith.constant 0 : i32
    %c0_i32_0 = arith.constant 0 : i32
    return %arg0, %c0_i32 : i32, i32
  }
  func.func @transform_1(%arg0: i32) -> (i32, i32) {
    %c0_i32 = arith.constant 0 : i32
    %c0_i32_0 = arith.constant 0 : i32
    %c0_i32_1 = arith.constant 0 : i32
    return %c0_i32, %c0_i32_0 : i32, i32
  }
  func.func @transform_2(%arg0: i32) -> (i32, i32) {
    %c0_i32 = arith.constant 0 : i32
    %c0_i32_0 = arith.constant 0 : i32
    %c0_i32_1 = arith.constant 0 : i32
    return %c0_i32, %c0_i32_0 : i32, i32
  }
  func.func @transform_3(%arg0: i32) -> (i32, i32) {
    %c0_i32 = arith.constant 0 : i32
    %c0_i32_0 = arith.constant 0 : i32
    %c0_i32_1 = arith.constant 0 : i32
    return %c0_i32, %c0_i32_0 : i32, i32
  }
  func.func @transform_4(%arg0: i32) -> (i32, i32) {
    %c0_i32 = arith.constant 0 : i32
    %c0_i32_0 = arith.constant 0 : i32
    %c0_i32_1 = arith.constant 0 : i32
    return %c0_i32, %c0_i32_0 : i32, i32
  }
  func.func @transform_5(%arg0: i32) -> (i32, i32) {
    %c0_i32 = arith.constant 0 : i32
    %c0_i32_0 = arith.constant 0 : i32
    return %arg0, %c0_i32 : i32, i32
  }
}

</mosaic_0001>

<llo_original>
// kernel: tpu_custom_call.1
$region0: #{tpu_custom_call.1}
  #allocation0 [shape = 'u32[]', space=smem, size = 0x4, offset = 0x4, fixed_abs, tag = 'smem constant byte address 0x4 - core index']
  #allocation1 [shape = 'u32[144,128]{1,0:T(1,128)}', space=vmem, size = 0x12000, scoped, tag = 'internal scratch']
  %s0 = inlined_call_operand.hbm [shape: f32[128,128], index: 0, kind: input, shape index: {}]
  %s1 = inlined_call_operand.hbm [shape: f32[128,256], index: 1, kind: input, shape index: {}]
  %s2 = inlined_call_operand.vmem [shape: f32[1,256], index: 2, kind: input, shape index: {}]
  %s3 = inlined_call_operand.hbm [shape: f32[256,128], index: 3, kind: input, shape index: {}]
  %s4 = inlined_call_operand.vmem [shape: f32[1,128], index: 4, kind: input, shape index: {}]
  %s5 = inlined_call_operand.hbm [shape: f32[128,128], index: 5, kind: output, shape index: {}]
  %s6 = sld [smem:[#allocation0]]
  $region42: #{tpu_custom_call.1} parent=0
    _
  %s8 = ssub.s32 1, %s6
  %s9 = scalar_select 0, %s8, %s6
  $region1: #{tpu_custom_call.1} parent=0
    #allocation2 [shape = 'u8[65536]{0}', space=vmem, size = 0x10000, scoped, tag = 'input window, operand 0, single buffered']
    #allocation3 [shape = 's32[1]{0}', space=sflag, size = 0x4, scoped, tag = 'scoped memory for tpu_custom_call.1']
    #allocation4 [shape = 's32[1]{0}', space=sflag, size = 0x4, scoped, tag = 'scoped memory for tpu_custom_call.1']
    #allocation5 [shape = 'u8[131072]{0}', space=vmem, size = 0x20000, scoped, tag = 'input window, operand 1, single buffered']
    #allocation6 [shape = 's32[1]{0}', space=sflag, size = 0x4, scoped, tag = 'scoped memory for tpu_custom_call.1']
    #allocation7 [shape = 'u8[131072]{0}', space=vmem, size = 0x20000, scoped, tag = 'input window, operand 3, single buffered']
    #allocation8 [shape = 'u8[65536]{0}', space=vmem, size = 0x10000, scoped, tag = 'output window, operand 0, single buffered']
    %10 = vsyncpa [#allocation3], 0
    %11 = vsyncpa [#allocation6], 0
    %12 = vsyncpa [#allocation4], 0
    // Predicated region
    $region2: #{tpu_custom_call.1} parent=1 // pred_check
      _
    $region3: #{tpu_custom_call.1} parent=1 // pred_check_branch
      %14 = sbr.rel (0) target = $region5
    $region4: #{tpu_custom_call.1} parent=1 // pred_region
      %s16 = ssub.s32 2048, 2048
      %17 = vsyncadd [#allocation3], %s16
      %s18 = sshll.u32 [#allocation2], 4
      %s19 = int_to_ptr.vmem [resolvable:$true] %s18
      %24 = dma.hbm_to_vmem [thread:$0]  %s0, 2048, %s19, [#allocation3], 128, 128, 8
    $region5: #{tpu_custom_call.1} parent=1 // pred_fallthru
      _
    // Predicated region
    $region6: #{tpu_custom_call.1} parent=1 // pred_check
      _
    $region7: #{tpu_custom_call.1} parent=1 // pred_check_branch
      %26 = sbr.rel (0) target = $region9
    $region8: #{tpu_custom_call.1} parent=1 // pred_region
      %s28 = ssub.s32 4096, 4096
      %29 = vsyncadd [#allocation6], %s28
      %s30 = sshll.u32 [#allocation5], 4
      %s31 = int_to_ptr.vmem [resolvable:$true] %s30
      %36 = dma.hbm_to_vmem [thread:$0]  %s1, 4096, %s31, [#allocation6], 256, 256, 16
    $region9: #{tpu_custom_call.1} parent=1 // pred_fallthru
      _
    // Predicated region
    $region10: #{tpu_custom_call.1} parent=1 // pred_check
      _
    $region11: #{tpu_custom_call.1} parent=1 // pred_check_branch
      %38 = sbr.rel (0) target = $region13
    $region12: #{tpu_custom_call.1} parent=1 // pred_region
      _
    $region13: #{tpu_custom_call.1} parent=1 // pred_fallthru
      _
    // Predicated region
    $region14: #{tpu_custom_call.1} parent=1 // pred_check
      _
    $region15: #{tpu_custom_call.1} parent=1 // pred_check_branch
      %40 = sbr.rel (0) target = $region17
    $region16: #{tpu_custom_call.1} parent=1 // pred_region
      %s42 = ssub.s32 4096, 4096
      %43 = vsyncadd [#allocation6], %s42
      %s44 = sshll.u32 [#allocation7], 4
      %s45 = int_to_ptr.vmem [resolvable:$true] %s44
      %50 = dma.hbm_to_vmem [thread:$0]  %s3, 4096, %s45, [#allocation6], 128, 128, 8
    $region17: #{tpu_custom_call.1} parent=1 // pred_fallthru
      _
    // Predicated region
    $region18: #{tpu_custom_call.1} parent=1 // pred_check
      _
    $region19: #{tpu_custom_call.1} parent=1 // pred_check_branch
      %52 = sbr.rel (0) target = $region21
    $region20: #{tpu_custom_call.1} parent=1 // pred_region
      _
    $region21: #{tpu_custom_call.1} parent=1 // pred_fallthru
      _
    // Predicated region
    $region22: #{tpu_custom_call.1} parent=1 // pred_check
      _
    $region23: #{tpu_custom_call.1} parent=1 // pred_check_branch
      %54 = sbr.rel (0) target = $region25
    $region24: #{tpu_custom_call.1} parent=1 // pred_region
      %55 = dma.done [#allocation3], 2048
    $region25: #{tpu_custom_call.1} parent=1 // pred_fallthru
      _
    // Predicated region
    $region26: #{tpu_custom_call.1} parent=1 // pred_check
      _
    $region27: #{tpu_custom_call.1} parent=1 // pred_check_branch
      %57 = sbr.rel (0) target = $region29
    $region28: #{tpu_custom_call.1} parent=1 // pred_region
      %58 = dma.done [#allocation6], 4096
    $region29: #{tpu_custom_call.1} parent=1 // pred_fallthru
      _
    // Predicated region
    $region30: #{tpu_custom_call.1} parent=1 // pred_check
      _
    $region31: #{tpu_custom_call.1} parent=1 // pred_check_branch
      %60 = sbr.rel (0) target = $region33
    $region32: #{tpu_custom_call.1} parent=1 // pred_region
      %61 = dma.done [#allocation6], 4096
    $region33: #{tpu_custom_call.1} parent=1 // pred_fallthru
      _
    %v62 = vld [vmem:[#allocation2] sm:$0xff]
    %v63 = vld [vmem:[#allocation2 + $0x8] sm:$0xff]
    %v64 = vld [vmem:[#allocation2 + $0x10] sm:$0xff]
    %v65 = vld [vmem:[#allocation2 + $0x18] sm:$0xff]
    %v66 = vld [vmem:[#allocation2 + $0x20] sm:$0xff]
    %v67 = vld [vmem:[#allocation2 + $0x28] sm:$0xff]
    %v68 = vld [vmem:[#allocation2 + $0x30] sm:$0xff]
    %v69 = vld [vmem:[#allocation2 + $0x38] sm:$0xff]
    %v70 = vld [vmem:[#allocation2 + $0x40] sm:$0xff]
    %v71 = vld [vmem:[#allocation2 + $0x48] sm:$0xff]
    %v72 = vld [vmem:[#allocation2 + $0x50] sm:$0xff]
    %v73 = vld [vmem:[#allocation2 + $0x58] sm:$0xff]
    %v74 = vld [vmem:[#allocation2 + $0x60] sm:$0xff]
    %v75 = vld [vmem:[#allocation2 + $0x68] sm:$0xff]
    %v76 = vld [vmem:[#allocation2 + $0x70] sm:$0xff]
    %v77 = vld [vmem:[#allocation2 + $0x78] sm:$0xff]
    %v78 = vld [vmem:[#allocation5] sm:$0xff]
    %v79 = vld [vmem:[#allocation5 + $0x8] sm:$0xff]
    %v80 = vld [vmem:[#allocation5 + $0x10] sm:$0xff]
    %v81 = vld [vmem:[#allocation5 + $0x18] sm:$0xff]
    %v82 = vld [vmem:[#allocation5 + $0x20] sm:$0xff]
    %v83 = vld [vmem:[#allocation5 + $0x28] sm:$0xff]
    %v84 = vld [vmem:[#allocation5 + $0x30] sm:$0xff]
    %v85 = vld [vmem:[#allocation5 + $0x38] sm:$0xff]
    %v86 = vld [vmem:[#allocation5 + $0x40] sm:$0xff]
    %v87 = vld [vmem:[#allocation5 + $0x48] sm:$0xff]
    %v88 = vld [vmem:[#allocation5 + $0x50] sm:$0xff]
    %v89 = vld [vmem:[#allocation5 + $0x58] sm:$0xff]
    %v90 = vld [vmem:[#allocation5 + $0x60] sm:$0xff]
    %v91 = vld [vmem:[#allocation5 + $0x68] sm:$0xff]
    %v92 = vld [vmem:[#allocation5 + $0x70] sm:$0xff]
    %v93 = vld [vmem:[#allocation5 + $0x78] sm:$0xff]
    %v94 = vld [vmem:[#allocation5 + $0x80] sm:$0xff]
    %v95 = vld [vmem:[#allocation5 + $0x88] sm:$0xff]
    %v96 = vld [vmem:[#allocation5 + $0x90] sm:$0xff]
    %v97 = vld [vmem:[#allocation5 + $0x98] sm:$0xff]
    %v98 = vld [vmem:[#allocation5 + $0xa0] sm:$0xff]
    %v99 = vld [vmem:[#allocation5 + $0xa8] sm:$0xff]
    %v100 = vld [vmem:[#allocation5 + $0xb0] sm:$0xff]
    %v101 = vld [vmem:[#allocation5 + $0xb8] sm:$0xff]
    %v102 = vld [vmem:[#allocation5 + $0xc0] sm:$0xff]
    %v103 = vld [vmem:[#allocation5 + $0xc8] sm:$0xff]
    %v104 = vld [vmem:[#allocation5 + $0xd0] sm:$0xff]
    %v105 = vld [vmem:[#allocation5 + $0xd8] sm:$0xff]
    %v106 = vld [vmem:[#allocation5 + $0xe0] sm:$0xff]
    %v107 = vld [vmem:[#allocation5 + $0xe8] sm:$0xff]
    %v108 = vld [vmem:[#allocation5 + $0xf0] sm:$0xff]
    %v109 = vld [vmem:[#allocation5 + $0xf8] sm:$0xff]
    %v110 = vld [vmem:[%s2] sm:$0x3]
    %v112 = vlaneseq
    %v113 = vshrl.u32 %v112, 7
    %v114 = vsub.s32 0, %v113
    %v115 = vrot.slane %v110, %v114
    %v116 = vlaneseq
    %v117 = vshrl.u32 %v116, 7
    %v118 = vsub.s32 1, %v117
    %v119 = vrot.slane %v110, %v118
    %122 = vmatprep.subr.mxu0 %v79
    %123 = vmatpush1.msra.mxu0 %v78
    %124 = vmatprep.subr.mxu0 %v81
    %125 = vmatpush1.msra.mxu0 %v80
    %126 = vmatprep.subr.mxu0 %v83
    %127 = vmatpush1.msra.mxu0 %v82
    %128 = vmatprep.subr.mxu0 %v85
    %129 = vmatpush1.msra.mxu0 %v84
    %130 = vmatprep.subr.mxu0 %v87
    %131 = vmatpush1.msra.mxu0 %v86
    %132 = vmatprep.subr.mxu0 %v89
    %133 = vmatpush1.msra.mxu0 %v88
    %134 = vmatprep.subr.mxu0 %v91
    %135 = vmatpush1.msra.mxu0 %v90
    %136 = vmatprep.subr.mxu0 %v93
    %137 = vmatpush1.msra.mxu0 %v92
    %138 = vmatprep.subr.mxu0 %v95
    %139 = vmatpush1.msra.mxu0 %v94
    %140 = vmatprep.subr.mxu0 %v97
    %141 = vmatpush1.msra.mxu0 %v96
    %142 = vmatprep.subr.mxu0 %v99
    %143 = vmatpush1.msra.mxu0 %v98
    %144 = vmatprep.subr.mxu0 %v101
    %145 = vmatpush1.msra.mxu0 %v100
    %146 = vmatprep.subr.mxu0 %v103
    %147 = vmatpush1.msra.mxu0 %v102
    %148 = vmatprep.subr.mxu0 %v105
    %149 = vmatpush1.msra.mxu0 %v104
    %150 = vmatprep.subr.mxu0 %v107
    %151 = vmatpush1.msra.mxu0 %v106
    %152 = vmatprep.subr.mxu0 %v109
    %153 = vmatpush1.msra.mxu0 %v108
    %154 = vmatprep.subr.mxu0 0.0
    %155 = vmatpush1.msra.mxu0 0.0
    %156 = vmatprep.subr.mxu0 0.0
    %157 = vmatpush1.msra.mxu0 0.0
    %158 = vmatprep.subr.mxu0 0.0
    %159 = vmatpush1.msra.mxu0 0.0
    %160 = vmatprep.subr.mxu0 0.0
    %161 = vmatpush1.msra.mxu0 0.0
    %162 = vmatprep.subr.mxu0 0.0
    %163 = vmatpush1.msra.mxu0 0.0
    %164 = vmatprep.subr.mxu0 0.0
    %165 = vmatpush1.msra.mxu0 0.0
    %166 = vmatprep.subr.mxu0 0.0
    %167 = vmatpush1.msra.mxu0 0.0
    %168 = vmatprep.subr.mxu0 0.0
    %169 = vmatpush1.msra.mxu0 0.0
    %170 = vmatprep.subr.mxu0 0.0
    %171 = vmatpush1.msra.mxu0 0.0
    %172 = vmatprep.subr.mxu0 0.0
    %173 = vmatpush1.msra.mxu0 0.0
    %174 = vmatprep.subr.mxu0 0.0
    %175 = vmatpush1.msra.mxu0 0.0
    %176 = vmatprep.subr.mxu0 0.0
    %177 = vmatpush1.msra.mxu0 0.0
    %178 = vmatprep.subr.mxu0 0.0
    %179 = vmatpush1.msra.mxu0 0.0
    %180 = vmatprep.subr.mxu0 0.0
    %181 = vmatpush1.msra.mxu0 0.0
    %182 = vmatprep.subr.mxu0 0.0
    %183 = vmatpush1.msra.mxu0 0.0
    %184 = vmatprep.subr.mxu0 0.0
    %185 = vmatpush1.msra.mxu0 0.0
    %186 = vmatprep.mubr.f32.mxu0 0.0
    %187 = vmatmul.mubr.f32.gmra.mrb[0].mxu0 %v62
    %v188 = vpop.f32.mrb[0].mxu0
    %v189 = vadd.f32 %v115, %v188
    %v190 = vpop.f32.mrb[0].mxu0
    %v191 = vadd.f32 %v119, %v190
    %192 = vmatprep.mubr.f32.mxu0 0.0
    %193 = vmatmul.mubr.f32.gmra.mrb[0].mxu0 %v63
    %v194 = vpop.f32.mrb[0].mxu0
    %v195 = vadd.f32 %v115, %v194
    %v196 = vpop.f32.mrb[0].mxu0
    %v197 = vadd.f32 %v119, %v196
    %198 = vmatprep.mubr.f32.mxu0 0.0
    %199 = vmatmul.mubr.f32.gmra.mrb[0].mxu0 %v64
    %v200 = vpop.f32.mrb[0].mxu0
    %v201 = vadd.f32 %v115, %v200
    %v202 = vpop.f32.mrb[0].mxu0
    %v203 = vadd.f32 %v119, %v202
    %204 = vmatprep.mubr.f32.mxu0 0.0
    %205 = vmatmul.mubr.f32.gmra.mrb[0].mxu0 %v65
    %v206 = vpop.f32.mrb[0].mxu0
    %v207 = vadd.f32 %v115, %v206
    %v208 = vpop.f32.mrb[0].mxu0
    %v209 = vadd.f32 %v119, %v208
    %210 = vmatprep.mubr.f32.mxu0 0.0
    %211 = vmatmul.mubr.f32.gmra.mrb[0].mxu0 %v66
    %v212 = vpop.f32.mrb[0].mxu0
    %v213 = vadd.f32 %v115, %v212
    %v214 = vpop.f32.mrb[0].mxu0
    %v215 = vadd.f32 %v119, %v214
    %216 = vmatprep.mubr.f32.mxu0 0.0
    %217 = vmatmul.mubr.f32.gmra.mrb[0].mxu0 %v67
    %v218 = vpop.f32.mrb[0].mxu0
    %v219 = vadd.f32 %v115, %v218
    %v220 = vpop.f32.mrb[0].mxu0
    %v221 = vadd.f32 %v119, %v220
    %222 = vmatprep.mubr.f32.mxu0 0.0
    %223 = vmatmul.mubr.f32.gmra.mrb[0].mxu0 %v68
    %v224 = vpop.f32.mrb[0].mxu0
    %v225 = vadd.f32 %v115, %v224
    %v226 = vpop.f32.mrb[0].mxu0
    %v227 = vadd.f32 %v119, %v226
    %228 = vmatprep.mubr.f32.mxu0 0.0
    %229 = vmatmul.mubr.f32.gmra.mrb[0].mxu0 %v69
    %v230 = vpop.f32.mrb[0].mxu0
    %v231 = vadd.f32 %v115, %v230
    %v232 = vpop.f32.mrb[0].mxu0
    %v233 = vadd.f32 %v119, %v232
    %234 = vmatprep.mubr.f32.mxu0 0.0
    %235 = vmatmul.mubr.f32.gmra.mrb[0].mxu0 %v70
    %v236 = vpop.f32.mrb[0].mxu0
    %v237 = vadd.f32 %v115, %v236
    %v238 = vpop.f32.mrb[0].mxu0
    %v239 = vadd.f32 %v119, %v238
    %240 = vmatprep.mubr.f32.mxu0 0.0
    %241 = vmatmul.mubr.f32.gmra.mrb[0].mxu0 %v71
    %v242 = vpop.f32.mrb[0].mxu0
    %v243 = vadd.f32 %v115, %v242
    %v244 = vpop.f32.mrb[0].mxu0
    %v245 = vadd.f32 %v119, %v244
    %246 = vmatprep.mubr.f32.mxu0 0.0
    %247 = vmatmul.mubr.f32.gmra.mrb[0].mxu0 %v72
    %v248 = vpop.f32.mrb[0].mxu0
    %v249 = vadd.f32 %v115, %v248
    %v250 = vpop.f32.mrb[0].mxu0
    %v251 = vadd.f32 %v119, %v250
    %252 = vmatprep.mubr.f32.mxu0 0.0
    %253 = vmatmul.mubr.f32.gmra.mrb[0].mxu0 %v73
    %v254 = vpop.f32.mrb[0].mxu0
    %v255 = vadd.f32 %v115, %v254
    %v256 = vpop.f32.mrb[0].mxu0
    %v257 = vadd.f32 %v119, %v256
    %258 = vmatprep.mubr.f32.mxu0 0.0
    %259 = vmatmul.mubr.f32.gmra.mrb[0].mxu0 %v74
    %v260 = vpop.f32.mrb[0].mxu0
    %v261 = vadd.f32 %v115, %v260
    %v262 = vpop.f32.mrb[0].mxu0
    %v263 = vadd.f32 %v119, %v262
    %264 = vmatprep.mubr.f32.mxu0 0.0
    %265 = vmatmul.mubr.f32.gmra.mrb[0].mxu0 %v75
    %v266 = vpop.f32.mrb[0].mxu0
    %v267 = vadd.f32 %v115, %v266
    %v268 = vpop.f32.mrb[0].mxu0
    %v269 = vadd.f32 %v119, %v268
    %270 = vmatprep.mubr.f32.mxu0 0.0
    %271 = vmatmul.mubr.f32.gmra.mrb[0].mxu0 %v76
    %v272 = vpop.f32.mrb[0].mxu0
    %v273 = vadd.f32 %v115, %v272
    %v274 = vpop.f32.mrb[0].mxu0
    %v275 = vadd.f32 %v119, %v274
    %276 = vmatprep.mubr.f32.mxu0 0.0
    %277 = vmatmul.mubr.f32.gmra.mrb[0].mxu0 %v77
    %v278 = vpop.f32.mrb[0].mxu0
    %v279 = vadd.f32 %v115, %v278
    %v280 = vpop.f32.mrb[0].mxu0
    %v281 = vadd.f32 %v119, %v280
    %282 = vdwg.mxu0
    %v283 = vmax.f32 %v189, 0.0
    %v284 = vmax.f32 %v191, 0.0
    %v285 = vmax.f32 %v195, 0.0
    %v286 = vmax.f32 %v197, 0.0
    %v287 = vmax.f32 %v201, 0.0
    %v288 = vmax.f32 %v203, 0.0
    %v289 = vmax.f32 %v207, 0.0
    %v290 = vmax.f32 %v209, 0.0
    %v291 = vmax.f32 %v213, 0.0
    %v292 = vmax.f32 %v215, 0.0
    %v293 = vmax.f32 %v219, 0.0
    %v294 = vmax.f32 %v221, 0.0
    %v295 = vmax.f32 %v225, 0.0
    %v296 = vmax.f32 %v227, 0.0
    %v297 = vmax.f32 %v231, 0.0
    %v298 = vmax.f32 %v233, 0.0
    %v299 = vmax.f32 %v237, 0.0
    %v300 = vmax.f32 %v239, 0.0
    %v301 = vmax.f32 %v243, 0.0
    %v302 = vmax.f32 %v245, 0.0
    %v303 = vmax.f32 %v249, 0.0
    %v304 = vmax.f32 %v251, 0.0
    %v305 = vmax.f32 %v255, 0.0
    %v306 = vmax.f32 %v257, 0.0
    %v307 = vmax.f32 %v261, 0.0
    %v308 = vmax.f32 %v263, 0.0
    %v309 = vmax.f32 %v267, 0.0
    %v310 = vmax.f32 %v269, 0.0
    %v311 = vmax.f32 %v273, 0.0
    %v312 = vmax.f32 %v275, 0.0
    %v313 = vmax.f32 %v279, 0.0
    %v314 = vmax.f32 %v281, 0.0
    %v315 = vld [vmem:[#allocation7] sm:$0xff]
    %v316 = vld [vmem:[#allocation7 + $0x8] sm:$0xff]
    %v317 = vld [vmem:[#allocation7 + $0x10] sm:$0xff]
    %v318 = vld [vmem:[#allocation7 + $0x18] sm:$0xff]
    %v319 = vld [vmem:[#allocation7 + $0x20] sm:$0xff]
    %v320 = vld [vmem:[#allocation7 + $0x28] sm:$0xff]
    %v321 = vld [vmem:[#allocation7 + $0x30] sm:$0xff]
    %v322 = vld [vmem:[#allocation7 + $0x38] sm:$0xff]
    %v323 = vld [vmem:[#allocation7 + $0x40] sm:$0xff]
    %v324 = vld [vmem:[#allocation7 + $0x48] sm:$0xff]
    %v325 = vld [vmem:[#allocation7 + $0x50] sm:$0xff]
    %v326 = vld [vmem:[#allocation7 + $0x58] sm:$0xff]
    %v327 = vld [vmem:[#allocation7 + $0x60] sm:$0xff]
    %v328 = vld [vmem:[#allocation7 + $0x68] sm:$0xff]
    %v329 = vld [vmem:[#allocation7 + $0x70] sm:$0xff]
    %v330 = vld [vmem:[#allocation7 + $0x78] sm:$0xff]
    %v331 = vld [vmem:[#allocation7 + $0x80] sm:$0xff]
    %v332 = vld [vmem:[#allocation7 + $0x88] sm:$0xff]
    %v333 = vld [vmem:[#allocation7 + $0x90] sm:$0xff]
    %v334 = vld [vmem:[#allocation7 + $0x98] sm:$0xff]
    %v335 = vld [vmem:[#allocation7 + $0xa0] sm:$0xff]
    %v336 = vld [vmem:[#allocation7 + $0xa8] sm:$0xff]
    %v337 = vld [vmem:[#allocation7 + $0xb0] sm:$0xff]
    %v338 = vld [vmem:[#allocation7 + $0xb8] sm:$0xff]
    %v339 = vld [vmem:[#allocation7 + $0xc0] sm:$0xff]
    %v340 = vld [vmem:[#allocation7 + $0xc8] sm:$0xff]
    %v341 = vld [vmem:[#allocation7 + $0xd0] sm:$0xff]
    %v342 = vld [vmem:[#allocation7 + $0xd8] sm:$0xff]
    %v343 = vld [vmem:[#allocation7 + $0xe0] sm:$0xff]
    %v344 = vld [vmem:[#allocation7 + $0xe8] sm:$0xff]
    %v345 = vld [vmem:[#allocation7 + $0xf0] sm:$0xff]
    %v346 = vld [vmem:[#allocation7 + $0xf8] sm:$0xff]
    %v347 = vld [vmem:[%s4] sm:$0x1]
    %v349 = vlaneseq
    %v350 = vshrl.u32 %v349, 7
    %v351 = vsub.s32 0, %v350
    %v352 = vrot.slane %v347, %v351
    %354 = vmatprep.subr.mxu0 0.0
    %355 = vmatpush1.msra.mxu0 %v315
    %356 = vmatprep.subr.mxu0 0.0
    %357 = vmatpush1.msra.mxu0 %v316
    %358 = vmatprep.subr.mxu0 0.0
    %359 = vmatpush1.msra.mxu0 %v317
    %360 = vmatprep.subr.mxu0 0.0
    %361 = vmatpush1.msra.mxu0 %v318
    %362 = vmatprep.subr.mxu0 0.0
    %363 = vmatpush1.msra.mxu0 %v319
    %364 = vmatprep.subr.mxu0 0.0
    %365 = vmatpush1.msra.mxu0 %v320
    %366 = vmatprep.subr.mxu0 0.0
    %367 = vmatpush1.msra.mxu0 %v321
    %368 = vmatprep.subr.mxu0 0.0
    %369 = vmatpush1.msra.mxu0 %v322
    %370 = vmatprep.subr.mxu0 0.0
    %371 = vmatpush1.msra.mxu0 %v323
    %372 = vmatprep.subr.mxu0 0.0
    %373 = vmatpush1.msra.mxu0 %v324
    %374 = vmatprep.subr.mxu0 0.0
    %375 = vmatpush1.msra.mxu0 %v325
    %376 = vmatprep.subr.mxu0 0.0
    %377 = vmatpush1.msra.mxu0 %v326
    %378 = vmatprep.subr.mxu0 0.0
    %379 = vmatpush1.msra.mxu0 %v327
    %380 = vmatprep.subr.mxu0 0.0
    %381 = vmatpush1.msra.mxu0 %v328
    %382 = vmatprep.subr.mxu0 0.0
    %383 = vmatpush1.msra.mxu0 %v329
    %384 = vmatprep.subr.mxu0 0.0
    %385 = vmatpush1.msra.mxu0 %v330
    %386 = vmatprep.subr.mxu0 0.0
    %387 = vmatpush1.msra.mxu0 %v331
    %388 = vmatprep.subr.mxu0 0.0
    %389 = vmatpush1.msra.mxu0 %v332
    %390 = vmatprep.subr.mxu0 0.0
    %391 = vmatpush1.msra.mxu0 %v333
    %392 = vmatprep.subr.mxu0 0.0
    %393 = vmatpush1.msra.mxu0 %v334
    %394 = vmatprep.subr.mxu0 0.0
    %395 = vmatpush1.msra.mxu0 %v335
    %396 = vmatprep.subr.mxu0 0.0
    %397 = vmatpush1.msra.mxu0 %v336
    %398 = vmatprep.subr.mxu0 0.0
    %399 = vmatpush1.msra.mxu0 %v337
    %400 = vmatprep.subr.mxu0 0.0
    %401 = vmatpush1.msra.mxu0 %v338
    %402 = vmatprep.subr.mxu0 0.0
    %403 = vmatpush1.msra.mxu0 %v339
    %404 = vmatprep.subr.mxu0 0.0
    %405 = vmatpush1.msra.mxu0 %v340
    %406 = vmatprep.subr.mxu0 0.0
    %407 = vmatpush1.msra.mxu0 %v341
    %408 = vmatprep.subr.mxu0 0.0
    %409 = vmatpush1.msra.mxu0 %v342
    %410 = vmatprep.subr.mxu0 0.0
    %411 = vmatpush1.msra.mxu0 %v343
    %412 = vmatprep.subr.mxu0 0.0
    %413 = vmatpush1.msra.mxu0 %v344
    %414 = vmatprep.subr.mxu0 0.0
    %415 = vmatpush1.msra.mxu0 %v345
    %416 = vmatprep.subr.mxu0 0.0
    %417 = vmatpush1.msra.mxu0 %v346
    %418 = vmatprep.mubr.f32.mxu0 %v284
    %419 = vmatmul.mubr.f32.gmra.mrb[0].mxu0 %v283
    %v420 = vpop.f32.mrb[0].mxu0
    %v421 = vadd.f32 %v352, %v420
    %v422 = vpop.f32.mrb[0].mxu0
    %423 = vmatprep.mubr.f32.mxu0 %v286
    %424 = vmatmul.mubr.f32.gmra.mrb[0].mxu0 %v285
    %v425 = vpop.f32.mrb[0].mxu0
    %v426 = vadd.f32 %v352, %v425
    %v427 = vpop.f32.mrb[0].mxu0
    %428 = vmatprep.mubr.f32.mxu0 %v288
    %429 = vmatmul.mubr.f32.gmra.mrb[0].mxu0 %v287
    %v430 = vpop.f32.mrb[0].mxu0
    %v431 = vadd.f32 %v352, %v430
    %v432 = vpop.f32.mrb[0].mxu0
    %433 = vmatprep.mubr.f32.mxu0 %v290
    %434 = vmatmul.mubr.f32.gmra.mrb[0].mxu0 %v289
    %v435 = vpop.f32.mrb[0].mxu0
    %v436 = vadd.f32 %v352, %v435
    %v437 = vpop.f32.mrb[0].mxu0
    %438 = vmatprep.mubr.f32.mxu0 %v292
    %439 = vmatmul.mubr.f32.gmra.mrb[0].mxu0 %v291
    %v440 = vpop.f32.mrb[0].mxu0
    %v441 = vadd.f32 %v352, %v440
    %v442 = vpop.f32.mrb[0].mxu0
    %443 = vmatprep.mubr.f32.mxu0 %v294
    %444 = vmatmul.mubr.f32.gmra.mrb[0].mxu0 %v293
    %v445 = vpop.f32.mrb[0].mxu0
    %v446 = vadd.f32 %v352, %v445
    %v447 = vpop.f32.mrb[0].mxu0
    %448 = vmatprep.mubr.f32.mxu0 %v296
    %449 = vmatmul.mubr.f32.gmra.mrb[0].mxu0 %v295
    %v450 = vpop.f32.mrb[0].mxu0
    %v451 = vadd.f32 %v352, %v450
    %v452 = vpop.f32.mrb[0].mxu0
    %453 = vmatprep.mubr.f32.mxu0 %v298
    %454 = vmatmul.mubr.f32.gmra.mrb[0].mxu0 %v297
    %v455 = vpop.f32.mrb[0].mxu0
    %v456 = vadd.f32 %v352, %v455
    %v457 = vpop.f32.mrb[0].mxu0
    %458 = vmatprep.mubr.f32.mxu0 %v300
    %459 = vmatmul.mubr.f32.gmra.mrb[0].mxu0 %v299
    %v460 = vpop.f32.mrb[0].mxu0
    %v461 = vadd.f32 %v352, %v460
    %v462 = vpop.f32.mrb[0].mxu0
    %463 = vmatprep.mubr.f32.mxu0 %v302
    %464 = vmatmul.mubr.f32.gmra.mrb[0].mxu0 %v301
    %v465 = vpop.f32.mrb[0].mxu0
    %v466 = vadd.f32 %v352, %v465
    %v467 = vpop.f32.mrb[0].mxu0
    %468 = vmatprep.mubr.f32.mxu0 %v304
    %469 = vmatmul.mubr.f32.gmra.mrb[0].mxu0 %v303
    %v470 = vpop.f32.mrb[0].mxu0
    %v471 = vadd.f32 %v352, %v470
    %v472 = vpop.f32.mrb[0].mxu0
    %473 = vmatprep.mubr.f32.mxu0 %v306
    %474 = vmatmul.mubr.f32.gmra.mrb[0].mxu0 %v305
    %v475 = vpop.f32.mrb[0].mxu0
    %v476 = vadd.f32 %v352, %v475
    %v477 = vpop.f32.mrb[0].mxu0
    %478 = vmatprep.mubr.f32.mxu0 %v308
    %479 = vmatmul.mubr.f32.gmra.mrb[0].mxu0 %v307
    %v480 = vpop.f32.mrb[0].mxu0
    %v481 = vadd.f32 %v352, %v480
    %v482 = vpop.f32.mrb[0].mxu0
    %483 = vmatprep.mubr.f32.mxu0 %v310
    %484 = vmatmul.mubr.f32.gmra.mrb[0].mxu0 %v309
    %v485 = vpop.f32.mrb[0].mxu0
    %v486 = vadd.f32 %v352, %v485
    %v487 = vpop.f32.mrb[0].mxu0
    %488 = vmatprep.mubr.f32.mxu0 %v312
    %489 = vmatmul.mubr.f32.gmra.mrb[0].mxu0 %v311
    %v490 = vpop.f32.mrb[0].mxu0
    %v491 = vadd.f32 %v352, %v490
    %v492 = vpop.f32.mrb[0].mxu0
    %493 = vmatprep.mubr.f32.mxu0 %v314
    %494 = vmatmul.mubr.f32.gmra.mrb[0].mxu0 %v313
    %v495 = vpop.f32.mrb[0].mxu0
    %v496 = vadd.f32 %v352, %v495
    %v497 = vpop.f32.mrb[0].mxu0
    %498 = vdwg.mxu0
    %499 = vst [vmem:[#allocation8] sm:$0xff] %v421
    %500 = vst [vmem:[#allocation8 + $0x8] sm:$0xff] %v426
    %501 = vst [vmem:[#allocation8 + $0x10] sm:$0xff] %v431
    %502 = vst [vmem:[#allocation8 + $0x18] sm:$0xff] %v436
    %503 = vst [vmem:[#allocation8 + $0x20] sm:$0xff] %v441
    %504 = vst [vmem:[#allocation8 + $0x28] sm:$0xff] %v446
    %505 = vst [vmem:[#allocation8 + $0x30] sm:$0xff] %v451
    %506 = vst [vmem:[#allocation8 + $0x38] sm:$0xff] %v456
    %507 = vst [vmem:[#allocation8 + $0x40] sm:$0xff] %v461
    %508 = vst [vmem:[#allocation8 + $0x48] sm:$0xff] %v466
    %509 = vst [vmem:[#allocation8 + $0x50] sm:$0xff] %v471
    %510 = vst [vmem:[#allocation8 + $0x58] sm:$0xff] %v476
    %511 = vst [vmem:[#allocation8 + $0x60] sm:$0xff] %v481
    %512 = vst [vmem:[#allocation8 + $0x68] sm:$0xff] %v486
    %513 = vst [vmem:[#allocation8 + $0x70] sm:$0xff] %v491
    %514 = vst [vmem:[#allocation8 + $0x78] sm:$0xff] %v496
    // Predicated region
    $region34: #{tpu_custom_call.1} parent=1 // pred_check
      _
    $region35: #{tpu_custom_call.1} parent=1 // pred_check_branch
      %516 = sbr.rel (0) target = $region37
    $region36: #{tpu_custom_call.1} parent=1 // pred_region
      %s518 = ssub.s32 2048, 2048
      %519 = vsyncadd [#allocation4], %s518
      %s520 = sshll.u32 [#allocation8], 4
      %s521 = int_to_ptr.vmem [resolvable:$true] %s520
      %526 = dma.vmem_to_hbm [thread:$0]  %s521, 2048, %s5, [#allocation4], 128, 128, 8
    $region37: #{tpu_custom_call.1} parent=1 // pred_fallthru
      _
    // Predicated region
    $region38: #{tpu_custom_call.1} parent=1 // pred_check
      _
    $region39: #{tpu_custom_call.1} parent=1 // pred_check_branch
      %528 = sbr.rel (0) target = $region41
    $region40: #{tpu_custom_call.1} parent=1 // pred_region
      %529 = dma.done [#allocation4], 2048
    $region41: #{tpu_custom_call.1} parent=1 // pred_fallthru
      _
    %530 = vsyncpa [#allocation3], 1
    %531 = vsyncpa [#allocation6], 1
    %532 = vsyncpa [#allocation4], 1

</llo_original>
